<compile_context>
chip_gen: v5e
topology: v5e:2x2
jax: 0.10.0
libtpu: 0.0.40
codegen_flags: <defaults>
</compile_context>

<pallas_src>
import functools

import jax
import jax.numpy as jnp
from jax.experimental import pallas as pl
from jax.experimental.pallas import tpu as pltpu


def _round_up(v, m):
    return ((v + m - 1) // m) * m


def _mlp_kernel(x_ref, w1t_ref, b1_ref, w2t_ref, b2_ref, o_ref):
    """All tensors are lane-dense: the batch sits on the last (lane) axis."""
    xT = x_ref[...]                        # (n_in, bn)
    n_in = xT.shape[0]
    if n_in <= 8:
        # Tiny contraction depth: unrolled VPU broadcast-FMAs (dense
        # (n_hidden, bn) vregs), no mostly-zero MXU pass.
        w1t = w1t_ref[...]                 # (n_hidden, n_in)
        z = b1_ref[...]                    # (n_hidden, 1) -> broadcast on lanes
        for k in range(n_in):              # unrolled at trace time
            z = z + w1t[:, k:k + 1] * xT[k:k + 1, :]
    else:
        z = jnp.dot(w1t_ref[...], xT, preferred_element_type=jnp.float32)
        z = z + b1_ref[...]
    h1 = jnp.tanh(z)                       # EUP transcendental, (n_hidden, bn)
    # Layer 2 on the MXU, contracted over n_hidden; result (n_out, bn) is
    # lane-dense so the bias add / square / store all run on dense vregs.
    y = jnp.dot(w2t_ref[...], h1, preferred_element_type=jnp.float32)
    y = y + b2_ref[...]                    # (n_out, 1) broadcast
    o_ref[...] = (y * y).astype(o_ref.dtype)


@functools.partial(jax.jit, static_argnames=("block_n",))
def net_forward(x, w1, b1, w2, b2, *, block_n=4096):
    """Pallas implementation of Net.forward.

    x  : (N, n_input)           float32
    w1 : (n_input, n_hidden)    b1 : (1, n_hidden) or (n_hidden,)
    w2 : (n_hidden, n_output)   b2 : (1, n_output) or (n_output,)
    returns (N, n_output) float32
    """
    N, n_in = x.shape
    n_hidden = w1.shape[1]
    n_out = w2.shape[1]

    # Batch-on-lanes layout: bn must be a multiple of 128.  Single block for
    # small N; balanced >=2 blocks for larger N so the "parallel" grid axis
    # can be sharded across both TensorCores on v7x.
    n_blocks = max(1, -(-N // block_n))
    bn = _round_up(-(-N // n_blocks), 128)
    padded_N = bn * n_blocks

    xT = x.T                                     # (n_in, N), wrapper transpose
    if padded_N != N:
        xT = jnp.pad(xT, ((0, 0), (0, padded_N - N)))
    w1t = w1.T                                   # (n_hidden, n_in)
    b1c = jnp.reshape(b1, (n_hidden, 1))
    w2t = w2.T                                   # (n_out, n_hidden)
    b2c = jnp.reshape(b2, (n_out, 1))

    cost = pl.CostEstimate(
        flops=2 * padded_N * (n_in * n_hidden + n_hidden * n_out)
        + padded_N * (n_hidden + 2 * n_out),
        transcendentals=padded_N * n_hidden,
        bytes_accessed=4 * (padded_N * (n_in + n_out)
                            + n_hidden * (n_in + n_out + 1) + n_out),
    )

    outT = pl.pallas_call(
        _mlp_kernel,
        out_shape=jax.ShapeDtypeStruct((n_out, padded_N), jnp.float32),
        grid_spec=pltpu.PrefetchScalarGridSpec(
            num_scalar_prefetch=0,
            grid=(n_blocks,),
            in_specs=[
                pl.BlockSpec((n_in, bn), lambda i: (0, i)),         # x^T tile
                pl.BlockSpec((n_hidden, n_in), lambda i: (0, 0)),   # W1^T
                pl.BlockSpec((n_hidden, 1), lambda i: (0, 0)),      # b1
                pl.BlockSpec((n_out, n_hidden), lambda i: (0, 0)),  # W2^T
                pl.BlockSpec((n_out, 1), lambda i: (0, 0)),         # b2
            ],
            out_specs=pl.BlockSpec((n_out, bn), lambda i: (0, i)),
        ),
        compiler_params=pltpu.CompilerParams(
            dimension_semantics=("parallel",),
        ),
        cost_estimate=cost,
    )(xT, w1t, b1c, w2t, b2c)
    return outT[:, :N].T


def init_params(key, n_input, n_hidden, n_output):
    """Deterministic init mimicking torch.nn.Linear default
    (uniform(-1/sqrt(fan_in), 1/sqrt(fan_in))); weights stored as
    (in_features, out_features)."""
    k1, k2, k3, k4 = jax.random.split(key, 4)
    bound1 = 1.0 / jnp.sqrt(jnp.float32(n_input))
    bound2 = 1.0 / jnp.sqrt(jnp.float32(n_hidden))
    w1 = jax.random.uniform(k1, (n_input, n_hidden), jnp.float32, -bound1, bound1)
    b1 = jax.random.uniform(k2, (1, n_hidden), jnp.float32, -bound1, bound1)
    w2 = jax.random.uniform(k3, (n_hidden, n_output), jnp.float32, -bound2, bound2)
    b2 = jax.random.uniform(k4, (1, n_output), jnp.float32, -bound2, bound2)
    return w1, b1, w2, b2


def reference_forward(x, w1, b1, w2, b2):
    h1 = jnp.tanh(x @ w1 + b1)
    return (h1 @ w2 + b2) ** 2


if __name__ == "__main__":
    key = jax.random.PRNGKey(0)
    k_x, k_p = jax.random.split(key)

    # Shapes from the module spec: N=2000 rows, D_in=2; hidden/output small.
    N, n_input, n_hidden, n_output = 2000, 2, 32, 4

    x = jax.random.uniform(k_x, (N, n_input), jnp.float32, -1.0, 1.0)
    w1, b1, w2, b2 = init_params(k_p, n_input, n_hidden, n_output)

    out = net_forward(x, w1, b1, w2, b2)
    out = jax.block_until_ready(out)

    ref = reference_forward(x, w1, b1, w2, b2)
    assert out.shape == (N, n_output)
    assert jnp.allclose(out, ref, atol=1e-5, rtol=1e-5)

    print("KERNEL_OK")
</pallas_src>

<mosaic_0001>
module attributes {stable_mosaic.version = 11 : i64} {
  func.func @_mlp_kernel(%arg0: i32, %arg1: memref<2x2048xf32, #tpu.memory_space<vmem>>, %arg2: memref<32x2xf32, #tpu.memory_space<vmem>>, %arg3: memref<32x1xf32, #tpu.memory_space<vmem>>, %arg4: memref<4x32xf32, #tpu.memory_space<vmem>>, %arg5: memref<4x1xf32, #tpu.memory_space<vmem>>, %arg6: memref<4x2048xf32, #tpu.memory_space<vmem>>) attributes {dimension_semantics = [#tpu.dimension_semantics<parallel>], iteration_bounds = array<i64: 1>, scalar_prefetch = 0 : i64, scratch_operands = 0 : i64, tpu.core_type = #tpu.core_type<tc>, window_params = [{transform_indices = @transform_0, window_bounds = array<i64: 2, 2048>}, {pipeline_mode = #tpu.pipeline_mode<synchronous>, transform_indices = @transform_1, window_bounds = array<i64: 32, 2>}, {pipeline_mode = #tpu.pipeline_mode<synchronous>, transform_indices = @transform_2, window_bounds = array<i64: 32, 1>}, {pipeline_mode = #tpu.pipeline_mode<synchronous>, transform_indices = @transform_3, window_bounds = array<i64: 4, 32>}, {pipeline_mode = #tpu.pipeline_mode<synchronous>, transform_indices = @transform_4, window_bounds = array<i64: 4, 1>}, {transform_indices = @transform_5, window_bounds = array<i64: 4, 2048>}]} {
    %c0 = arith.constant 0 : index
    %c0_0 = arith.constant 0 : index
    %0 = vector.load %arg1[%c0, %c0_0] : memref<2x2048xf32, #tpu.memory_space<vmem>>, vector<2x2048xf32>
    %c0_1 = arith.constant 0 : index
    %c0_2 = arith.constant 0 : index
    %1 = vector.load %arg2[%c0_1, %c0_2] : memref<32x2xf32, #tpu.memory_space<vmem>>, vector<32x2xf32>
    %c0_3 = arith.constant 0 : index
    %c0_4 = arith.constant 0 : index
    %2 = vector.load %arg3[%c0_3, %c0_4] : memref<32x1xf32, #tpu.memory_space<vmem>>, vector<32x1xf32>
    %3 = vector.extract_strided_slice %1 {offsets = [0, 0], sizes = [32, 1], strides = [1, 1]} : vector<32x2xf32> to vector<32x1xf32>
    %4 = vector.extract_strided_slice %0 {offsets = [0, 0], sizes = [1, 2048], strides = [1, 1]} : vector<2x2048xf32> to vector<1x2048xf32>
    %5 = vector.broadcast %3 : vector<32x1xf32> to vector<32x2048xf32>
    %6 = vector.broadcast %4 : vector<1x2048xf32> to vector<32x2048xf32>
    %7 = arith.mulf %5, %6 : vector<32x2048xf32>
    %8 = vector.broadcast %2 : vector<32x1xf32> to vector<32x2048xf32>
    %9 = arith.addf %8, %7 : vector<32x2048xf32>
    %10 = vector.extract_strided_slice %1 {offsets = [0, 1], sizes = [32, 1], strides = [1, 1]} : vector<32x2xf32> to vector<32x1xf32>
    %11 = vector.extract_strided_slice %0 {offsets = [1, 0], sizes = [1, 2048], strides = [1, 1]} : vector<2x2048xf32> to vector<1x2048xf32>
    %12 = vector.broadcast %10 : vector<32x1xf32> to vector<32x2048xf32>
    %13 = vector.broadcast %11 : vector<1x2048xf32> to vector<32x2048xf32>
    %14 = arith.mulf %12, %13 : vector<32x2048xf32>
    %15 = arith.addf %9, %14 : vector<32x2048xf32>
    %16 = math.tanh %15 : vector<32x2048xf32>
    %c0_5 = arith.constant 0 : index
    %c0_6 = arith.constant 0 : index
    %17 = vector.load %arg4[%c0_5, %c0_6] : memref<4x32xf32, #tpu.memory_space<vmem>>, vector<4x32xf32>
    %cst = arith.constant dense<0.000000e+00> : vector<4x2048xf32>
    %18 = tpu.matmul %17, %16, %cst {dimension_numbers = #tpu.dot_dimension_numbers<[1], [0], [0], [1], [0, 0, 1, 1], [], []>} : vector<4x32xf32>, vector<32x2048xf32>, vector<4x2048xf32> -> vector<4x2048xf32>
    %c0_7 = arith.constant 0 : index
    %c0_8 = arith.constant 0 : index
    %19 = vector.load %arg5[%c0_7, %c0_8] : memref<4x1xf32, #tpu.memory_space<vmem>>, vector<4x1xf32>
    %20 = vector.broadcast %19 : vector<4x1xf32> to vector<4x2048xf32>
    %21 = arith.addf %18, %20 : vector<4x2048xf32>
    %22 = arith.mulf %21, %21 : vector<4x2048xf32>
    %c0_9 = arith.constant 0 : index
    %c0_10 = arith.constant 0 : index
    %23 = vector.load %arg6[%c0_9, %c0_10] : memref<4x2048xf32, #tpu.memory_space<vmem>>, vector<4x2048xf32>
    tpu.vector_store %arg6[%c0_9, %c0_10], %22 {strides = array<i32>} : memref<4x2048xf32, #tpu.memory_space<vmem>>, vector<4x2048xf32>,
    return
  }
  func.func @transform_0(%arg0: i32) -> (i32, i32) {
    %c0_i32 = arith.constant 0 : i32
    %c0_i32_0 = arith.constant 0 : i32
    return %c0_i32, %arg0 : i32, i32
  }
  func.func @transform_1(%arg0: i32) -> (i32, i32) {
    %c0_i32 = arith.constant 0 : i32
    %c0_i32_0 = arith.constant 0 : i32
    %c0_i32_1 = arith.constant 0 : i32
    return %c0_i32, %c0_i32_0 : i32, i32
  }
  func.func @transform_2(%arg0: i32) -> (i32, i32) {
    %c0_i32 = arith.constant 0 : i32
    %c0_i32_0 = arith.constant 0 : i32
    %c0_i32_1 = arith.constant 0 : i32
    return %c0_i32, %c0_i32_0 : i32, i32
  }
  func.func @transform_3(%arg0: i32) -> (i32, i32) {
    %c0_i32 = arith.constant 0 : i32
    %c0_i32_0 = arith.constant 0 : i32
    %c0_i32_1 = arith.constant 0 : i32
    return %c0_i32, %c0_i32_0 : i32, i32
  }
  func.func @transform_4(%arg0: i32) -> (i32, i32) {
    %c0_i32 = arith.constant 0 : i32
    %c0_i32_0 = arith.constant 0 : i32
    %c0_i32_1 = arith.constant 0 : i32
    return %c0_i32, %c0_i32_0 : i32, i32
  }
  func.func @transform_5(%arg0: i32) -> (i32, i32) {
    %c0_i32 = arith.constant 0 : i32
    %c0_i32_0 = arith.constant 0 : i32
    return %c0_i32, %arg0 : i32, i32
  }
}

</mosaic_0001>

<llo_original>
// kernel: net_forward.1
$region0: #{net_forward.1}
  #allocation0 [shape = 'u32[]', space=smem, size = 0x4, offset = 0x4, fixed_abs, tag = 'smem constant byte address 0x4 - core index']
  #allocation1 [shape = 'u32[72,128]{1,0:T(1,128)}', space=vmem, size = 0x9000, scoped, tag = 'internal scratch']
  %s0 = inlined_call_operand.vmem [shape: f32[2,2048], index: 0, kind: input, shape index: {}]
  %s1 = inlined_call_operand.vmem [shape: f32[32,2], index: 1, kind: input, shape index: {}]
  %s2 = inlined_call_operand.vmem [shape: f32[32,1], index: 2, kind: input, shape index: {}]
  %s3 = inlined_call_operand.vmem [shape: f32[4,32], index: 3, kind: input, shape index: {}]
  %s4 = inlined_call_operand.vmem [shape: f32[4,1], index: 4, kind: input, shape index: {}]
  %s5 = inlined_call_operand.vmem [shape: f32[4,2048], index: 5, kind: output, shape index: {}]
  %s6 = sld [smem:[#allocation0]]
  $region30: #{net_forward.1} parent=0
    _
  %s8 = ssub.s32 1, %s6
  %s9 = scalar_select 0, %s8, %s6
  // Predicated region
  $region2: #{net_forward.1} parent=0 // pred_check
    _
  $region3: #{net_forward.1} parent=0 // pred_check_branch
    %11 = sbr.rel (0) target = $region5
  $region4: #{net_forward.1} parent=0 // pred_region
    _
  $region5: #{net_forward.1} parent=0 // pred_fallthru
    _
  // Predicated region
  $region6: #{net_forward.1} parent=0 // pred_check
    _
  $region7: #{net_forward.1} parent=0 // pred_check_branch
    %13 = sbr.rel (0) target = $region9
  $region8: #{net_forward.1} parent=0 // pred_region
    _
  $region9: #{net_forward.1} parent=0 // pred_fallthru
    _
  // Predicated region
  $region10: #{net_forward.1} parent=0 // pred_check
    _
  $region11: #{net_forward.1} parent=0 // pred_check_branch
    %15 = sbr.rel (0) target = $region13
  $region12: #{net_forward.1} parent=0 // pred_region
    _
  $region13: #{net_forward.1} parent=0 // pred_fallthru
    _
  // Predicated region
  $region14: #{net_forward.1} parent=0 // pred_check
    _
  $region15: #{net_forward.1} parent=0 // pred_check_branch
    %17 = sbr.rel (0) target = $region17
  $region16: #{net_forward.1} parent=0 // pred_region
    _
  $region17: #{net_forward.1} parent=0 // pred_fallthru
    _
  // Predicated region
  $region18: #{net_forward.1} parent=0 // pred_check
    _
  $region19: #{net_forward.1} parent=0 // pred_check_branch
    %19 = sbr.rel (0) target = $region21
  $region20: #{net_forward.1} parent=0 // pred_region
    _
  $region21: #{net_forward.1} parent=0 // pred_fallthru
    _
  %v20 = vld [vmem:[%s0] sm:$0xff]
  %v21 = vld [vmem:[%s0 + $0x8] sm:$0xff]
  %v22 = vld [vmem:[%s0 + $0x10] sm:$0xff]
  %v23 = vld [vmem:[%s0 + $0x18] sm:$0xff]
  %v24 = vld [vmem:[%s1] sm:$0xff]
  %v25 = vld [vmem:[%s1 + $0x8] sm:$0xff]
  %v26 = vld [vmem:[%s1 + $0x10] sm:$0xff]
  %v27 = vld [vmem:[%s1 + $0x18] sm:$0xff]
  %v28 = vld [vmem:[%s2] sm:$0xff]
  %v29 = vld [vmem:[%s2 + $0x8] sm:$0xff]
  %v30 = vld [vmem:[%s2 + $0x10] sm:$0xff]
  %v31 = vld [vmem:[%s2 + $0x18] sm:$0xff]
  %33 = vset.pattern.permute.xlu0 0
  %34 = vperm.xlu0 %33, %v24
  %v35 = vpop.permute.xlu0 %34
  %38 = vset.pattern.permute.xlu0 0
  %39 = vperm.xlu0 %38, %v25
  %v40 = vpop.permute.xlu0 %39
  %43 = vset.pattern.permute.xlu0 0
  %44 = vperm.xlu0 %43, %v26
  %v45 = vpop.permute.xlu0 %44
  %48 = vset.pattern.permute.xlu0 0
  %49 = vperm.xlu0 %48, %v27
  %v50 = vpop.permute.xlu0 %49
  %v56 = vperm.slane %v20, 0
  %v57 = vperm.slane %v20, 2
  %v58 = vperm.slane %v20, 4
  %v59 = vperm.slane %v20, 6
  %v60 = vperm.slane %v21, 0
  %v61 = vperm.slane %v21, 2
  %v62 = vperm.slane %v21, 4
  %v63 = vperm.slane %v21, 6
  %v64 = vperm.slane %v22, 0
  %v65 = vperm.slane %v22, 2
  %v66 = vperm.slane %v22, 4
  %v67 = vperm.slane %v22, 6
  %v68 = vperm.slane %v23, 0
  %v69 = vperm.slane %v23, 2
  %v70 = vperm.slane %v23, 4
  %v71 = vperm.slane %v23, 6
  %v88 = vperm.slane %v56, 0
  %v89 = vperm.slane %v57, 0
  %v90 = vperm.slane %v58, 0
  %v91 = vperm.slane %v59, 0
  %v92 = vperm.slane %v60, 0
  %v93 = vperm.slane %v61, 0
  %v94 = vperm.slane %v62, 0
  %v95 = vperm.slane %v63, 0
  %v96 = vperm.slane %v64, 0
  %v97 = vperm.slane %v65, 0
  %v98 = vperm.slane %v66, 0
  %v99 = vperm.slane %v67, 0
  %v100 = vperm.slane %v68, 0
  %v101 = vperm.slane %v69, 0
  %v102 = vperm.slane %v70, 0
  %v103 = vperm.slane %v71, 0
  %v104 = vmul.f32 %v35, %v88
  %v105 = vmul.f32 %v35, %v89
  %v106 = vmul.f32 %v35, %v90
  %v107 = vmul.f32 %v35, %v91
  %v108 = vmul.f32 %v35, %v92
  %v109 = vmul.f32 %v35, %v93
  %v110 = vmul.f32 %v35, %v94
  %v111 = vmul.f32 %v35, %v95
  %v112 = vmul.f32 %v35, %v96
  %v113 = vmul.f32 %v35, %v97
  %v114 = vmul.f32 %v35, %v98
  %v115 = vmul.f32 %v35, %v99
  %v116 = vmul.f32 %v35, %v100
  %v117 = vmul.f32 %v35, %v101
  %v118 = vmul.f32 %v35, %v102
  %v119 = vmul.f32 %v35, %v103
  %v120 = vmul.f32 %v40, %v88
  %v121 = vmul.f32 %v40, %v89
  %v122 = vmul.f32 %v40, %v90
  %v123 = vmul.f32 %v40, %v91
  %v124 = vmul.f32 %v40, %v92
  %v125 = vmul.f32 %v40, %v93
  %v126 = vmul.f32 %v40, %v94
  %v127 = vmul.f32 %v40, %v95
  %v128 = vmul.f32 %v40, %v96
  %v129 = vmul.f32 %v40, %v97
  %v130 = vmul.f32 %v40, %v98
  %v131 = vmul.f32 %v40, %v99
  %v132 = vmul.f32 %v40, %v100
  %v133 = vmul.f32 %v40, %v101
  %v134 = vmul.f32 %v40, %v102
  %v135 = vmul.f32 %v40, %v103
  %v136 = vmul.f32 %v45, %v88
  %v137 = vmul.f32 %v45, %v89
  %v138 = vmul.f32 %v45, %v90
  %v139 = vmul.f32 %v45, %v91
  %v140 = vmul.f32 %v45, %v92
  %v141 = vmul.f32 %v45, %v93
  %v142 = vmul.f32 %v45, %v94
  %v143 = vmul.f32 %v45, %v95
  %v144 = vmul.f32 %v45, %v96
  %v145 = vmul.f32 %v45, %v97
  %v146 = vmul.f32 %v45, %v98
  %v147 = vmul.f32 %v45, %v99
  %v148 = vmul.f32 %v45, %v100
  %v149 = vmul.f32 %v45, %v101
  %v150 = vmul.f32 %v45, %v102
  %v151 = vmul.f32 %v45, %v103
  %v152 = vmul.f32 %v50, %v88
  %v153 = vmul.f32 %v50, %v89
  %v154 = vmul.f32 %v50, %v90
  %v155 = vmul.f32 %v50, %v91
  %v156 = vmul.f32 %v50, %v92
  %v157 = vmul.f32 %v50, %v93
  %v158 = vmul.f32 %v50, %v94
  %v159 = vmul.f32 %v50, %v95
  %v160 = vmul.f32 %v50, %v96
  %v161 = vmul.f32 %v50, %v97
  %v162 = vmul.f32 %v50, %v98
  %v163 = vmul.f32 %v50, %v99
  %v164 = vmul.f32 %v50, %v100
  %v165 = vmul.f32 %v50, %v101
  %v166 = vmul.f32 %v50, %v102
  %v167 = vmul.f32 %v50, %v103
  %169 = vset.pattern.permute.xlu0 0
  %170 = vperm.xlu0 %169, %v28
  %v171 = vpop.permute.xlu0 %170
  %174 = vset.pattern.permute.xlu0 0
  %175 = vperm.xlu0 %174, %v29
  %v176 = vpop.permute.xlu0 %175
  %179 = vset.pattern.permute.xlu0 0
  %180 = vperm.xlu0 %179, %v30
  %v181 = vpop.permute.xlu0 %180
  %184 = vset.pattern.permute.xlu0 0
  %185 = vperm.xlu0 %184, %v31
  %v186 = vpop.permute.xlu0 %185
  %v188 = vadd.f32 %v171, %v104
  %v189 = vadd.f32 %v171, %v105
  %v190 = vadd.f32 %v171, %v106
  %v191 = vadd.f32 %v171, %v107
  %v192 = vadd.f32 %v171, %v108
  %v193 = vadd.f32 %v171, %v109
  %v194 = vadd.f32 %v171, %v110
  %v195 = vadd.f32 %v171, %v111
  %v196 = vadd.f32 %v171, %v112
  %v197 = vadd.f32 %v171, %v113
  %v198 = vadd.f32 %v171, %v114
  %v199 = vadd.f32 %v171, %v115
  %v200 = vadd.f32 %v171, %v116
  %v201 = vadd.f32 %v171, %v117
  %v202 = vadd.f32 %v171, %v118
  %v203 = vadd.f32 %v171, %v119
  %v204 = vadd.f32 %v176, %v120
  %v205 = vadd.f32 %v176, %v121
  %v206 = vadd.f32 %v176, %v122
  %v207 = vadd.f32 %v176, %v123
  %v208 = vadd.f32 %v176, %v124
  %v209 = vadd.f32 %v176, %v125
  %v210 = vadd.f32 %v176, %v126
  %v211 = vadd.f32 %v176, %v127
  %v212 = vadd.f32 %v176, %v128
  %v213 = vadd.f32 %v176, %v129
  %v214 = vadd.f32 %v176, %v130
  %v215 = vadd.f32 %v176, %v131
  %v216 = vadd.f32 %v176, %v132
  %v217 = vadd.f32 %v176, %v133
  %v218 = vadd.f32 %v176, %v134
  %v219 = vadd.f32 %v176, %v135
  %v220 = vadd.f32 %v181, %v136
  %v221 = vadd.f32 %v181, %v137
  %v222 = vadd.f32 %v181, %v138
  %v223 = vadd.f32 %v181, %v139
  %v224 = vadd.f32 %v181, %v140
  %v225 = vadd.f32 %v181, %v141
  %v226 = vadd.f32 %v181, %v142
  %v227 = vadd.f32 %v181, %v143
  %v228 = vadd.f32 %v181, %v144
  %v229 = vadd.f32 %v181, %v145
  %v230 = vadd.f32 %v181, %v146
  %v231 = vadd.f32 %v181, %v147
  %v232 = vadd.f32 %v181, %v148
  %v233 = vadd.f32 %v181, %v149
  %v234 = vadd.f32 %v181, %v150
  %v235 = vadd.f32 %v181, %v151
  %v236 = vadd.f32 %v186, %v152
  %v237 = vadd.f32 %v186, %v153
  %v238 = vadd.f32 %v186, %v154
  %v239 = vadd.f32 %v186, %v155
  %v240 = vadd.f32 %v186, %v156
  %v241 = vadd.f32 %v186, %v157
  %v242 = vadd.f32 %v186, %v158
  %v243 = vadd.f32 %v186, %v159
  %v244 = vadd.f32 %v186, %v160
  %v245 = vadd.f32 %v186, %v161
  %v246 = vadd.f32 %v186, %v162
  %v247 = vadd.f32 %v186, %v163
  %v248 = vadd.f32 %v186, %v164
  %v249 = vadd.f32 %v186, %v165
  %v250 = vadd.f32 %v186, %v166
  %v251 = vadd.f32 %v186, %v167
  %252 = vset.pattern.permute.xlu0 1
  %253 = vperm.xlu0 %252, %v24
  %v254 = vpop.permute.xlu0 %253
  %256 = vset.pattern.permute.xlu0 1
  %257 = vperm.xlu0 %256, %v25
  %v258 = vpop.permute.xlu0 %257
  %260 = vset.pattern.permute.xlu0 1
  %261 = vperm.xlu0 %260, %v26
  %v262 = vpop.permute.xlu0 %261
  %264 = vset.pattern.permute.xlu0 1
  %265 = vperm.xlu0 %264, %v27
  %v266 = vpop.permute.xlu0 %265
  %v268 = vperm.slane %v20, 1
  %v269 = vperm.slane %v20, 3
  %v270 = vperm.slane %v20, 5
  %v271 = vperm.slane %v20, 7
  %v272 = vperm.slane %v21, 1
  %v273 = vperm.slane %v21, 3
  %v274 = vperm.slane %v21, 5
  %v275 = vperm.slane %v21, 7
  %v276 = vperm.slane %v22, 1
  %v277 = vperm.slane %v22, 3
  %v278 = vperm.slane %v22, 5
  %v279 = vperm.slane %v22, 7
  %v280 = vperm.slane %v23, 1
  %v281 = vperm.slane %v23, 3
  %v282 = vperm.slane %v23, 5
  %v283 = vperm.slane %v23, 7
  %v300 = vperm.slane %v268, 1
  %v301 = vperm.slane %v269, 1
  %v302 = vperm.slane %v270, 1
  %v303 = vperm.slane %v271, 1
  %v304 = vperm.slane %v272, 1
  %v305 = vperm.slane %v273, 1
  %v306 = vperm.slane %v274, 1
  %v307 = vperm.slane %v275, 1
  %v308 = vperm.slane %v276, 1
  %v309 = vperm.slane %v277, 1
  %v310 = vperm.slane %v278, 1
  %v311 = vperm.slane %v279, 1
  %v312 = vperm.slane %v280, 1
  %v313 = vperm.slane %v281, 1
  %v314 = vperm.slane %v282, 1
  %v315 = vperm.slane %v283, 1
  %v316 = vmul.f32 %v254, %v300
  %v317 = vmul.f32 %v254, %v301
  %v318 = vmul.f32 %v254, %v302
  %v319 = vmul.f32 %v254, %v303
  %v320 = vmul.f32 %v254, %v304
  %v321 = vmul.f32 %v254, %v305
  %v322 = vmul.f32 %v254, %v306
  %v323 = vmul.f32 %v254, %v307
  %v324 = vmul.f32 %v254, %v308
  %v325 = vmul.f32 %v254, %v309
  %v326 = vmul.f32 %v254, %v310
  %v327 = vmul.f32 %v254, %v311
  %v328 = vmul.f32 %v254, %v312
  %v329 = vmul.f32 %v254, %v313
  %v330 = vmul.f32 %v254, %v314
  %v331 = vmul.f32 %v254, %v315
  %v332 = vmul.f32 %v258, %v300
  %v333 = vmul.f32 %v258, %v301
  %v334 = vmul.f32 %v258, %v302
  %v335 = vmul.f32 %v258, %v303
  %v336 = vmul.f32 %v258, %v304
  %v337 = vmul.f32 %v258, %v305
  %v338 = vmul.f32 %v258, %v306
  %v339 = vmul.f32 %v258, %v307
  %v340 = vmul.f32 %v258, %v308
  %v341 = vmul.f32 %v258, %v309
  %v342 = vmul.f32 %v258, %v310
  %v343 = vmul.f32 %v258, %v311
  %v344 = vmul.f32 %v258, %v312
  %v345 = vmul.f32 %v258, %v313
  %v346 = vmul.f32 %v258, %v314
  %v347 = vmul.f32 %v258, %v315
  %v348 = vmul.f32 %v262, %v300
  %v349 = vmul.f32 %v262, %v301
  %v350 = vmul.f32 %v262, %v302
  %v351 = vmul.f32 %v262, %v303
  %v352 = vmul.f32 %v262, %v304
  %v353 = vmul.f32 %v262, %v305
  %v354 = vmul.f32 %v262, %v306
  %v355 = vmul.f32 %v262, %v307
  %v356 = vmul.f32 %v262, %v308
  %v357 = vmul.f32 %v262, %v309
  %v358 = vmul.f32 %v262, %v310
  %v359 = vmul.f32 %v262, %v311
  %v360 = vmul.f32 %v262, %v312
  %v361 = vmul.f32 %v262, %v313
  %v362 = vmul.f32 %v262, %v314
  %v363 = vmul.f32 %v262, %v315
  %v364 = vmul.f32 %v266, %v300
  %v365 = vmul.f32 %v266, %v301
  %v366 = vmul.f32 %v266, %v302
  %v367 = vmul.f32 %v266, %v303
  %v368 = vmul.f32 %v266, %v304
  %v369 = vmul.f32 %v266, %v305
  %v370 = vmul.f32 %v266, %v306
  %v371 = vmul.f32 %v266, %v307
  %v372 = vmul.f32 %v266, %v308
  %v373 = vmul.f32 %v266, %v309
  %v374 = vmul.f32 %v266, %v310
  %v375 = vmul.f32 %v266, %v311
  %v376 = vmul.f32 %v266, %v312
  %v377 = vmul.f32 %v266, %v313
  %v378 = vmul.f32 %v266, %v314
  %v379 = vmul.f32 %v266, %v315
  %v380 = vadd.f32 %v188, %v316
  %v381 = vadd.f32 %v189, %v317
  %v382 = vadd.f32 %v190, %v318
  %v383 = vadd.f32 %v191, %v319
  %v384 = vadd.f32 %v192, %v320
  %v385 = vadd.f32 %v193, %v321
  %v386 = vadd.f32 %v194, %v322
  %v387 = vadd.f32 %v195, %v323
  %v388 = vadd.f32 %v196, %v324
  %v389 = vadd.f32 %v197, %v325
  %v390 = vadd.f32 %v198, %v326
  %v391 = vadd.f32 %v199, %v327
  %v392 = vadd.f32 %v200, %v328
  %v393 = vadd.f32 %v201, %v329
  %v394 = vadd.f32 %v202, %v330
  %v395 = vadd.f32 %v203, %v331
  %v396 = vadd.f32 %v204, %v332
  %v397 = vadd.f32 %v205, %v333
  %v398 = vadd.f32 %v206, %v334
  %v399 = vadd.f32 %v207, %v335
  %v400 = vadd.f32 %v208, %v336
  %v401 = vadd.f32 %v209, %v337
  %v402 = vadd.f32 %v210, %v338
  %v403 = vadd.f32 %v211, %v339
  %v404 = vadd.f32 %v212, %v340
  %v405 = vadd.f32 %v213, %v341
  %v406 = vadd.f32 %v214, %v342
  %v407 = vadd.f32 %v215, %v343
  %v408 = vadd.f32 %v216, %v344
  %v409 = vadd.f32 %v217, %v345
  %v410 = vadd.f32 %v218, %v346
  %v411 = vadd.f32 %v219, %v347
  %v412 = vadd.f32 %v220, %v348
  %v413 = vadd.f32 %v221, %v349
  %v414 = vadd.f32 %v222, %v350
  %v415 = vadd.f32 %v223, %v351
  %v416 = vadd.f32 %v224, %v352
  %v417 = vadd.f32 %v225, %v353
  %v418 = vadd.f32 %v226, %v354
  %v419 = vadd.f32 %v227, %v355
  %v420 = vadd.f32 %v228, %v356
  %v421 = vadd.f32 %v229, %v357
  %v422 = vadd.f32 %v230, %v358
  %v423 = vadd.f32 %v231, %v359
  %v424 = vadd.f32 %v232, %v360
  %v425 = vadd.f32 %v233, %v361
  %v426 = vadd.f32 %v234, %v362
  %v427 = vadd.f32 %v235, %v363
  %v428 = vadd.f32 %v236, %v364
  %v429 = vadd.f32 %v237, %v365
  %v430 = vadd.f32 %v238, %v366
  %v431 = vadd.f32 %v239, %v367
  %v432 = vadd.f32 %v240, %v368
  %v433 = vadd.f32 %v241, %v369
  %v434 = vadd.f32 %v242, %v370
  %v435 = vadd.f32 %v243, %v371
  %v436 = vadd.f32 %v244, %v372
  %v437 = vadd.f32 %v245, %v373
  %v438 = vadd.f32 %v246, %v374
  %v439 = vadd.f32 %v247, %v375
  %v440 = vadd.f32 %v248, %v376
  %v441 = vadd.f32 %v249, %v377
  %v442 = vadd.f32 %v250, %v378
  %v443 = vadd.f32 %v251, %v379
  %v444 = vtanh.pop %v380
  %v445 = vtanh.pop %v381
  %v446 = vtanh.pop %v382
  %v447 = vtanh.pop %v383
  %v448 = vtanh.pop %v384
  %v449 = vtanh.pop %v385
  %v450 = vtanh.pop %v386
  %v451 = vtanh.pop %v387
  %v452 = vtanh.pop %v388
  %v453 = vtanh.pop %v389
  %v454 = vtanh.pop %v390
  %v455 = vtanh.pop %v391
  %v456 = vtanh.pop %v392
  %v457 = vtanh.pop %v393
  %v458 = vtanh.pop %v394
  %v459 = vtanh.pop %v395
  %v460 = vtanh.pop %v396
  %v461 = vtanh.pop %v397
  %v462 = vtanh.pop %v398
  %v463 = vtanh.pop %v399
  %v464 = vtanh.pop %v400
  %v465 = vtanh.pop %v401
  %v466 = vtanh.pop %v402
  %v467 = vtanh.pop %v403
  %v468 = vtanh.pop %v404
  %v469 = vtanh.pop %v405
  %v470 = vtanh.pop %v406
  %v471 = vtanh.pop %v407
  %v472 = vtanh.pop %v408
  %v473 = vtanh.pop %v409
  %v474 = vtanh.pop %v410
  %v475 = vtanh.pop %v411
  %v476 = vtanh.pop %v412
  %v477 = vtanh.pop %v413
  %v478 = vtanh.pop %v414
  %v479 = vtanh.pop %v415
  %v480 = vtanh.pop %v416
  %v481 = vtanh.pop %v417
  %v482 = vtanh.pop %v418
  %v483 = vtanh.pop %v419
  %v484 = vtanh.pop %v420
  %v485 = vtanh.pop %v421
  %v486 = vtanh.pop %v422
  %v487 = vtanh.pop %v423
  %v488 = vtanh.pop %v424
  %v489 = vtanh.pop %v425
  %v490 = vtanh.pop %v426
  %v491 = vtanh.pop %v427
  %v492 = vtanh.pop %v428
  %v493 = vtanh.pop %v429
  %v494 = vtanh.pop %v430
  %v495 = vtanh.pop %v431
  %v496 = vtanh.pop %v432
  %v497 = vtanh.pop %v433
  %v498 = vtanh.pop %v434
  %v499 = vtanh.pop %v435
  %v500 = vtanh.pop %v436
  %v501 = vtanh.pop %v437
  %v502 = vtanh.pop %v438
  %v503 = vtanh.pop %v439
  %v504 = vtanh.pop %v440
  %v505 = vtanh.pop %v441
  %v506 = vtanh.pop %v442
  %v507 = vtanh.pop %v443
  %v508 = vld [vmem:[%s3] sm:$0xf]
  %v509 = vld [vmem:[%s4] sm:$0xf]
  %511 = vset.pattern.permute.xlu0 0
  %512 = vperm.xlu0 %511, %v509
  %v513 = vpop.permute.xlu0 %512
  %vm515 = vcmask 261120
  %v517 = vsel %vm515, %v508, 0
  %519 = vmatpush.msra.mxu0 0.0
  %520 = vmatpush.msra.mxu0 0.0
  %521 = vmatpush.msra.mxu0 0.0
  %522 = vmatpush.msra.mxu0 0.0
  %523 = vmatpush.msra.mxu0 0.0
  %524 = vmatpush.msra.mxu0 0.0
  %525 = vmatpush.msra.mxu0 0.0
  %526 = vmatpush.msra.mxu0 0.0
  %527 = vmatpush.msra.mxu0 0.0
  %528 = vmatpush.msra.mxu0 0.0
  %529 = vmatpush.msra.mxu0 0.0
  %530 = vmatpush.msra.mxu0 0.0
  %531 = vmatpush.msra.mxu0 %v492
  %532 = vmatpush.msra.mxu0 %v476
  %533 = vmatpush.msra.mxu0 %v460
  %534 = vmatpush.msra.mxu0 %v444
  %535 = vmatmul.f32.gmra.mxu0 %v517
  %v536 = vpop.f32.mrf.mxu0
  %v537 = vadd.f32 %v513, %v536
  %538 = vdwg.mxu0
  %539 = vmatpush.msra.mxu0 0.0
  %540 = vmatpush.msra.mxu0 0.0
  %541 = vmatpush.msra.mxu0 0.0
  %542 = vmatpush.msra.mxu0 0.0
  %543 = vmatpush.msra.mxu0 0.0
  %544 = vmatpush.msra.mxu0 0.0
  %545 = vmatpush.msra.mxu0 0.0
  %546 = vmatpush.msra.mxu0 0.0
  %547 = vmatpush.msra.mxu0 0.0
  %548 = vmatpush.msra.mxu0 0.0
  %549 = vmatpush.msra.mxu0 0.0
  %550 = vmatpush.msra.mxu0 0.0
  %551 = vmatpush.msra.mxu0 %v493
  %552 = vmatpush.msra.mxu0 %v477
  %553 = vmatpush.msra.mxu0 %v461
  %554 = vmatpush.msra.mxu0 %v445
  %555 = vmatmul.f32.gmra.mxu0 %v517
  %v556 = vpop.f32.mrf.mxu0
  %v557 = vadd.f32 %v513, %v556
  %558 = vdwg.mxu0
  %559 = vmatpush.msra.mxu0 0.0
  %560 = vmatpush.msra.mxu0 0.0
  %561 = vmatpush.msra.mxu0 0.0
  %562 = vmatpush.msra.mxu0 0.0
  %563 = vmatpush.msra.mxu0 0.0
  %564 = vmatpush.msra.mxu0 0.0
  %565 = vmatpush.msra.mxu0 0.0
  %566 = vmatpush.msra.mxu0 0.0
  %567 = vmatpush.msra.mxu0 0.0
  %568 = vmatpush.msra.mxu0 0.0
  %569 = vmatpush.msra.mxu0 0.0
  %570 = vmatpush.msra.mxu0 0.0
  %571 = vmatpush.msra.mxu0 %v494
  %572 = vmatpush.msra.mxu0 %v478
  %573 = vmatpush.msra.mxu0 %v462
  %574 = vmatpush.msra.mxu0 %v446
  %575 = vmatmul.f32.gmra.mxu0 %v517
  %v576 = vpop.f32.mrf.mxu0
  %v577 = vadd.f32 %v513, %v576
  %578 = vdwg.mxu0
  %579 = vmatpush.msra.mxu0 0.0
  %580 = vmatpush.msra.mxu0 0.0
  %581 = vmatpush.msra.mxu0 0.0
  %582 = vmatpush.msra.mxu0 0.0
  %583 = vmatpush.msra.mxu0 0.0
  %584 = vmatpush.msra.mxu0 0.0
  %585 = vmatpush.msra.mxu0 0.0
  %586 = vmatpush.msra.mxu0 0.0
  %587 = vmatpush.msra.mxu0 0.0
  %588 = vmatpush.msra.mxu0 0.0
  %589 = vmatpush.msra.mxu0 0.0
  %590 = vmatpush.msra.mxu0 0.0
  %591 = vmatpush.msra.mxu0 %v495
  %592 = vmatpush.msra.mxu0 %v479
  %593 = vmatpush.msra.mxu0 %v463
  %594 = vmatpush.msra.mxu0 %v447
  %595 = vmatmul.f32.gmra.mxu0 %v517
  %v596 = vpop.f32.mrf.mxu0
  %v597 = vadd.f32 %v513, %v596
  %598 = vdwg.mxu0
  %599 = vmatpush.msra.mxu0 0.0
  %600 = vmatpush.msra.mxu0 0.0
  %601 = vmatpush.msra.mxu0 0.0
  %602 = vmatpush.msra.mxu0 0.0
  %603 = vmatpush.msra.mxu0 0.0
  %604 = vmatpush.msra.mxu0 0.0
  %605 = vmatpush.msra.mxu0 0.0
  %606 = vmatpush.msra.mxu0 0.0
  %607 = vmatpush.msra.mxu0 0.0
  %608 = vmatpush.msra.mxu0 0.0
  %609 = vmatpush.msra.mxu0 0.0
  %610 = vmatpush.msra.mxu0 0.0
  %611 = vmatpush.msra.mxu0 %v496
  %612 = vmatpush.msra.mxu0 %v480
  %613 = vmatpush.msra.mxu0 %v464
  %614 = vmatpush.msra.mxu0 %v448
  %615 = vmatmul.f32.gmra.mxu0 %v517
  %v616 = vpop.f32.mrf.mxu0
  %v617 = vadd.f32 %v513, %v616
  %618 = vdwg.mxu0
  %619 = vmatpush.msra.mxu0 0.0
  %620 = vmatpush.msra.mxu0 0.0
  %621 = vmatpush.msra.mxu0 0.0
  %622 = vmatpush.msra.mxu0 0.0
  %623 = vmatpush.msra.mxu0 0.0
  %624 = vmatpush.msra.mxu0 0.0
  %625 = vmatpush.msra.mxu0 0.0
  %626 = vmatpush.msra.mxu0 0.0
  %627 = vmatpush.msra.mxu0 0.0
  %628 = vmatpush.msra.mxu0 0.0
  %629 = vmatpush.msra.mxu0 0.0
  %630 = vmatpush.msra.mxu0 0.0
  %631 = vmatpush.msra.mxu0 %v497
  %632 = vmatpush.msra.mxu0 %v481
  %633 = vmatpush.msra.mxu0 %v465
  %634 = vmatpush.msra.mxu0 %v449
  %635 = vmatmul.f32.gmra.mxu0 %v517
  %v636 = vpop.f32.mrf.mxu0
  %v637 = vadd.f32 %v513, %v636
  %638 = vdwg.mxu0
  %639 = vmatpush.msra.mxu0 0.0
  %640 = vmatpush.msra.mxu0 0.0
  %641 = vmatpush.msra.mxu0 0.0
  %642 = vmatpush.msra.mxu0 0.0
  %643 = vmatpush.msra.mxu0 0.0
  %644 = vmatpush.msra.mxu0 0.0
  %645 = vmatpush.msra.mxu0 0.0
  %646 = vmatpush.msra.mxu0 0.0
  %647 = vmatpush.msra.mxu0 0.0
  %648 = vmatpush.msra.mxu0 0.0
  %649 = vmatpush.msra.mxu0 0.0
  %650 = vmatpush.msra.mxu0 0.0
  %651 = vmatpush.msra.mxu0 %v498
  %652 = vmatpush.msra.mxu0 %v482
  %653 = vmatpush.msra.mxu0 %v466
  %654 = vmatpush.msra.mxu0 %v450
  %655 = vmatmul.f32.gmra.mxu0 %v517
  %v656 = vpop.f32.mrf.mxu0
  %v657 = vadd.f32 %v513, %v656
  %658 = vdwg.mxu0
  %659 = vmatpush.msra.mxu0 0.0
  %660 = vmatpush.msra.mxu0 0.0
  %661 = vmatpush.msra.mxu0 0.0
  %662 = vmatpush.msra.mxu0 0.0
  %663 = vmatpush.msra.mxu0 0.0
  %664 = vmatpush.msra.mxu0 0.0
  %665 = vmatpush.msra.mxu0 0.0
  %666 = vmatpush.msra.mxu0 0.0
  %667 = vmatpush.msra.mxu0 0.0
  %668 = vmatpush.msra.mxu0 0.0
  %669 = vmatpush.msra.mxu0 0.0
  %670 = vmatpush.msra.mxu0 0.0
  %671 = vmatpush.msra.mxu0 %v499
  %672 = vmatpush.msra.mxu0 %v483
  %673 = vmatpush.msra.mxu0 %v467
  %674 = vmatpush.msra.mxu0 %v451
  %675 = vmatmul.f32.gmra.mxu0 %v517
  %v676 = vpop.f32.mrf.mxu0
  %v677 = vadd.f32 %v513, %v676
  %678 = vdwg.mxu0
  %679 = vmatpush.msra.mxu0 0.0
  %680 = vmatpush.msra.mxu0 0.0
  %681 = vmatpush.msra.mxu0 0.0
  %682 = vmatpush.msra.mxu0 0.0
  %683 = vmatpush.msra.mxu0 0.0
  %684 = vmatpush.msra.mxu0 0.0
  %685 = vmatpush.msra.mxu0 0.0
  %686 = vmatpush.msra.mxu0 0.0
  %687 = vmatpush.msra.mxu0 0.0
  %688 = vmatpush.msra.mxu0 0.0
  %689 = vmatpush.msra.mxu0 0.0
  %690 = vmatpush.msra.mxu0 0.0
  %691 = vmatpush.msra.mxu0 %v500
  %692 = vmatpush.msra.mxu0 %v484
  %693 = vmatpush.msra.mxu0 %v468
  %694 = vmatpush.msra.mxu0 %v452
  %695 = vmatmul.f32.gmra.mxu0 %v517
  %v696 = vpop.f32.mrf.mxu0
  %v697 = vadd.f32 %v513, %v696
  %698 = vdwg.mxu0
  %699 = vmatpush.msra.mxu0 0.0
  %700 = vmatpush.msra.mxu0 0.0
  %701 = vmatpush.msra.mxu0 0.0
  %702 = vmatpush.msra.mxu0 0.0
  %703 = vmatpush.msra.mxu0 0.0
  %704 = vmatpush.msra.mxu0 0.0
  %705 = vmatpush.msra.mxu0 0.0
  %706 = vmatpush.msra.mxu0 0.0
  %707 = vmatpush.msra.mxu0 0.0
  %708 = vmatpush.msra.mxu0 0.0
  %709 = vmatpush.msra.mxu0 0.0
  %710 = vmatpush.msra.mxu0 0.0
  %711 = vmatpush.msra.mxu0 %v501
  %712 = vmatpush.msra.mxu0 %v485
  %713 = vmatpush.msra.mxu0 %v469
  %714 = vmatpush.msra.mxu0 %v453
  %715 = vmatmul.f32.gmra.mxu0 %v517
  %v716 = vpop.f32.mrf.mxu0
  %v717 = vadd.f32 %v513, %v716
  %718 = vdwg.mxu0
  %719 = vmatpush.msra.mxu0 0.0
  %720 = vmatpush.msra.mxu0 0.0
  %721 = vmatpush.msra.mxu0 0.0
  %722 = vmatpush.msra.mxu0 0.0
  %723 = vmatpush.msra.mxu0 0.0
  %724 = vmatpush.msra.mxu0 0.0
  %725 = vmatpush.msra.mxu0 0.0
  %726 = vmatpush.msra.mxu0 0.0
  %727 = vmatpush.msra.mxu0 0.0
  %728 = vmatpush.msra.mxu0 0.0
  %729 = vmatpush.msra.mxu0 0.0
  %730 = vmatpush.msra.mxu0 0.0
  %731 = vmatpush.msra.mxu0 %v502
  %732 = vmatpush.msra.mxu0 %v486
  %733 = vmatpush.msra.mxu0 %v470
  %734 = vmatpush.msra.mxu0 %v454
  %735 = vmatmul.f32.gmra.mxu0 %v517
  %v736 = vpop.f32.mrf.mxu0
  %v737 = vadd.f32 %v513, %v736
  %738 = vdwg.mxu0
  %739 = vmatpush.msra.mxu0 0.0
  %740 = vmatpush.msra.mxu0 0.0
  %741 = vmatpush.msra.mxu0 0.0
  %742 = vmatpush.msra.mxu0 0.0
  %743 = vmatpush.msra.mxu0 0.0
  %744 = vmatpush.msra.mxu0 0.0
  %745 = vmatpush.msra.mxu0 0.0
  %746 = vmatpush.msra.mxu0 0.0
  %747 = vmatpush.msra.mxu0 0.0
  %748 = vmatpush.msra.mxu0 0.0
  %749 = vmatpush.msra.mxu0 0.0
  %750 = vmatpush.msra.mxu0 0.0
  %751 = vmatpush.msra.mxu0 %v503
  %752 = vmatpush.msra.mxu0 %v487
  %753 = vmatpush.msra.mxu0 %v471
  %754 = vmatpush.msra.mxu0 %v455
  %755 = vmatmul.f32.gmra.mxu0 %v517
  %v756 = vpop.f32.mrf.mxu0
  %v757 = vadd.f32 %v513, %v756
  %758 = vdwg.mxu0
  %759 = vmatpush.msra.mxu0 0.0
  %760 = vmatpush.msra.mxu0 0.0
  %761 = vmatpush.msra.mxu0 0.0
  %762 = vmatpush.msra.mxu0 0.0
  %763 = vmatpush.msra.mxu0 0.0
  %764 = vmatpush.msra.mxu0 0.0
  %765 = vmatpush.msra.mxu0 0.0
  %766 = vmatpush.msra.mxu0 0.0
  %767 = vmatpush.msra.mxu0 0.0
  %768 = vmatpush.msra.mxu0 0.0
  %769 = vmatpush.msra.mxu0 0.0
  %770 = vmatpush.msra.mxu0 0.0
  %771 = vmatpush.msra.mxu0 %v504
  %772 = vmatpush.msra.mxu0 %v488
  %773 = vmatpush.msra.mxu0 %v472
  %774 = vmatpush.msra.mxu0 %v456
  %775 = vmatmul.f32.gmra.mxu0 %v517
  %v776 = vpop.f32.mrf.mxu0
  %v777 = vadd.f32 %v513, %v776
  %778 = vdwg.mxu0
  %779 = vmatpush.msra.mxu0 0.0
  %780 = vmatpush.msra.mxu0 0.0
  %781 = vmatpush.msra.mxu0 0.0
  %782 = vmatpush.msra.mxu0 0.0
  %783 = vmatpush.msra.mxu0 0.0
  %784 = vmatpush.msra.mxu0 0.0
  %785 = vmatpush.msra.mxu0 0.0
  %786 = vmatpush.msra.mxu0 0.0
  %787 = vmatpush.msra.mxu0 0.0
  %788 = vmatpush.msra.mxu0 0.0
  %789 = vmatpush.msra.mxu0 0.0
  %790 = vmatpush.msra.mxu0 0.0
  %791 = vmatpush.msra.mxu0 %v505
  %792 = vmatpush.msra.mxu0 %v489
  %793 = vmatpush.msra.mxu0 %v473
  %794 = vmatpush.msra.mxu0 %v457
  %795 = vmatmul.f32.gmra.mxu0 %v517
  %v796 = vpop.f32.mrf.mxu0
  %v797 = vadd.f32 %v513, %v796
  %798 = vdwg.mxu0
  %799 = vmatpush.msra.mxu0 0.0
  %800 = vmatpush.msra.mxu0 0.0
  %801 = vmatpush.msra.mxu0 0.0
  %802 = vmatpush.msra.mxu0 0.0
  %803 = vmatpush.msra.mxu0 0.0
  %804 = vmatpush.msra.mxu0 0.0
  %805 = vmatpush.msra.mxu0 0.0
  %806 = vmatpush.msra.mxu0 0.0
  %807 = vmatpush.msra.mxu0 0.0
  %808 = vmatpush.msra.mxu0 0.0
  %809 = vmatpush.msra.mxu0 0.0
  %810 = vmatpush.msra.mxu0 0.0
  %811 = vmatpush.msra.mxu0 %v506
  %812 = vmatpush.msra.mxu0 %v490
  %813 = vmatpush.msra.mxu0 %v474
  %814 = vmatpush.msra.mxu0 %v458
  %815 = vmatmul.f32.gmra.mxu0 %v517
  %v816 = vpop.f32.mrf.mxu0
  %v817 = vadd.f32 %v513, %v816
  %818 = vdwg.mxu0
  %819 = vmatpush.msra.mxu0 0.0
  %820 = vmatpush.msra.mxu0 0.0
  %821 = vmatpush.msra.mxu0 0.0
  %822 = vmatpush.msra.mxu0 0.0
  %823 = vmatpush.msra.mxu0 0.0
  %824 = vmatpush.msra.mxu0 0.0
  %825 = vmatpush.msra.mxu0 0.0
  %826 = vmatpush.msra.mxu0 0.0
  %827 = vmatpush.msra.mxu0 0.0
  %828 = vmatpush.msra.mxu0 0.0
  %829 = vmatpush.msra.mxu0 0.0
  %830 = vmatpush.msra.mxu0 0.0
  %831 = vmatpush.msra.mxu0 %v507
  %832 = vmatpush.msra.mxu0 %v491
  %833 = vmatpush.msra.mxu0 %v475
  %834 = vmatpush.msra.mxu0 %v459
  %835 = vmatmul.f32.gmra.mxu0 %v517
  %v836 = vpop.f32.mrf.mxu0
  %v837 = vadd.f32 %v513, %v836
  %838 = vdwg.mxu0
  %v839 = vmul.f32 %v537, %v537
  %v840 = vmul.f32 %v557, %v557
  %v841 = vmul.f32 %v577, %v577
  %v842 = vmul.f32 %v597, %v597
  %v843 = vmul.f32 %v617, %v617
  %v844 = vmul.f32 %v637, %v637
  %v845 = vmul.f32 %v657, %v657
  %v846 = vmul.f32 %v677, %v677
  %v847 = vmul.f32 %v697, %v697
  %v848 = vmul.f32 %v717, %v717
  %v849 = vmul.f32 %v737, %v737
  %v850 = vmul.f32 %v757, %v757
  %v851 = vmul.f32 %v777, %v777
  %v852 = vmul.f32 %v797, %v797
  %v853 = vmul.f32 %v817, %v817
  %v854 = vmul.f32 %v837, %v837
  %v871 = vrot.slane %v840, 4
  %v872 = vrot.slane %v842, 4
  %v873 = vrot.slane %v844, 4
  %v874 = vrot.slane %v846, 4
  %v875 = vrot.slane %v848, 4
  %v876 = vrot.slane %v850, 4
  %v877 = vrot.slane %v852, 4
  %v878 = vrot.slane %v854, 4
  %vm879 = vcmask 1043456
  %v880 = vsel %vm879, %v839, %v871
  %v881 = vsel %vm879, %v841, %v872
  %v882 = vsel %vm879, %v843, %v873
  %v883 = vsel %vm879, %v845, %v874
  %v884 = vsel %vm879, %v847, %v875
  %v885 = vsel %vm879, %v849, %v876
  %v886 = vsel %vm879, %v851, %v877
  %v887 = vsel %vm879, %v853, %v878
  %896 = vst [vmem:[%s5] sm:$0xff] %v880
  %897 = vst [vmem:[%s5 + $0x8] sm:$0xff] %v881
  %898 = vst [vmem:[%s5 + $0x10] sm:$0xff] %v882
  %899 = vst [vmem:[%s5 + $0x18] sm:$0xff] %v883
  %900 = vst [vmem:[%s5 + $0x20] sm:$0xff] %v884
  %901 = vst [vmem:[%s5 + $0x28] sm:$0xff] %v885
  %902 = vst [vmem:[%s5 + $0x30] sm:$0xff] %v886
  %903 = vst [vmem:[%s5 + $0x38] sm:$0xff] %v887
  // Predicated region
  $region22: #{net_forward.1} parent=0 // pred_check
    _
  $region23: #{net_forward.1} parent=0 // pred_check_branch
    %905 = sbr.rel (0) target = $region25
  $region24: #{net_forward.1} parent=0 // pred_region
    _
  $region25: #{net_forward.1} parent=0 // pred_fallthru
    _
  // Predicated region
  $region26: #{net_forward.1} parent=0 // pred_check
    _
  $region27: #{net_forward.1} parent=0 // pred_check_branch
    %907 = sbr.rel (0) target = $region29
  $region28: #{net_forward.1} parent=0 // pred_region
    _
  $region29: #{net_forward.1} parent=0 // pred_fallthru
    _

</llo_original>
